<compile_context>
chip_gen: v6e
topology: v6e:2x2x1
jax: 0.10.0
libtpu: 0.0.40
codegen_flags: <defaults>
</compile_context>

<pallas_src>
import functools

import jax
import jax.numpy as jnp
from jax import lax
from jax.experimental import pallas as pl
from jax.experimental.pallas import tpu as pltpu


def _round_up(a, b):
    return -(-a // b) * b


def _residual_conv_down_kernel(*refs, cin, separate_skip):
    """One grid step: o_tile = W_pad @ P_tile (conv + bias) + gain * skip_tile."""
    if separate_skip:
        gain_ref, p_ref, w_ref, skip_ref, o_ref = refs
    else:
        gain_ref, p_ref, w_ref, o_ref = refs

    # p_ref : (K_pad, TM) transposed patch slab; rows = (kh, kw, cin) taps, one
    #         ones-row (bias fold) and zero pad rows.  Lane (last) dim = pixels.
    # w_ref : (C, K_pad)  transposed conv weights with the bias column folded in.
    # o_ref : (C, TM)     lane-dense output tile (unmasked stores).
    p = p_ref[...]

    # Single fused MXU matmul over all 9 taps + bias row, f32 accumulation.
    delta = jnp.dot(w_ref[...], p, preferred_element_type=jnp.float32)

    if separate_skip:
        # bf16 MXU operands: the identity/skip path must NOT be quantized, so it
        # arrives as a separate f32 input.
        skip = skip_ref[...].astype(jnp.float32)
    else:
        # f32 operands: the (kh=1, kw=1) center tap already resident in VMEM is
        # exactly x[:, :, ::2, ::2] -- reuse it, no extra HBM traffic.
        skip = p[4 * cin:5 * cin, :].astype(jnp.float32)

    g = gain_ref[0]  # runtime gain scalar (SMEM) -> no recompile per gain value
    o_ref[...] = (delta + skip * g).astype(o_ref.dtype)


def residual_conv_downsample(x_nchw, w_hwio, bias, *, gain=1.0, block_m=512,
                             mxu_dtype=jnp.float32):
    """Residual(Conv2d(C, C, 3, stride=2, padding=1)) with nearest-0.5x skip path.

    x_nchw: (N, C, H, W) float32, H and W even.
    w_hwio: (3, 3, C, C) conv weights (kh, kw, cin, cout).
    bias  : (C,)
    gain  : runtime scalar (traced; no recompile per value).
    mxu_dtype: jnp.float32 (exact, default) or jnp.bfloat16 (production MXU rate;
               skip path stays f32).
    """
    N, C, H, W = x_nchw.shape
    assert H % 2 == 0 and W % 2 == 0, "nearest 0.5x downsample needs even H, W"
    OH, OW = H // 2, W // 2
    M = N * OH * OW

    LANE = 128
    f32_operands = jnp.dtype(mxu_dtype) == jnp.dtype(jnp.float32)
    sublane = 8 if f32_operands else 16
    K = 9 * C
    K_pad = _round_up(K + 1, sublane)          # 9C taps + ones row (bias), aligned

    # ---- tile sizing --------------------------------------------------------
    # Per-step VMEM (default double buffering):
    #   2*K_pad*tm + 2*C*K_pad + 2*C*tm  elements of `mxu_dtype` (+ f32 skip tile
    #   in bf16 mode).  block_m=512 fits comfortably for small/medium C on all
    #   generations; shrink block_m and/or use bf16 for large C on v7x (64 MiB).
    Mp = _round_up(M, LANE)                    # lane-dense output stores
    tm = max(LANE, (min(block_m, Mp) // LANE) * LANE)
    if tm >= 256:                              # 256-wide MXU tiles on v6e/v7x
        tm = (tm // 256) * 256
    if Mp >= 2 * LANE and Mp // tm < 2:        # >=2 grid steps -> both v7x TCs busy
        tm = max(LANE, (Mp // 2 // LANE) * LANE)
    Mp = _round_up(Mp, tm)                     # pad M instead of asserting divisibility

    # ---- wrapper-side layout plumbing (one fused gather, lane-dense) --------
    # Build the (K_pad, Mp) slab directly in the kernel's transposed layout:
    # rows = (kh, kw, cin) taps of the stride-2 conv, then a ones row (bias fold)
    # and zero pad rows; columns = (n, oh, ow) pixels.  No (M, 9C) intermediate,
    # no NHWC transpose, no full-slab transpose.
    x_pad = jnp.pad(x_nchw, ((0, 0), (0, 0), (1, 1), (1, 1)))     # (N, C, H+2, W+2)
    taps = []
    for kh in range(3):
        for kw in range(3):
            t = x_pad[:, :, kh:kh + 2 * OH:2, kw:kw + 2 * OW:2]   # (N, C, OH, OW)
            taps.append(jnp.transpose(t, (1, 0, 2, 3)).reshape(C, M))
    ones_row = jnp.ones((1, M), x_nchw.dtype)
    zero_rows = jnp.zeros((K_pad - K - 1, M), x_nchw.dtype)
    patches_t = jnp.concatenate(taps + [ones_row, zero_rows], axis=0)   # (K_pad, M)
    patches_t = jnp.pad(patches_t, ((0, 0), (0, Mp - M))).astype(mxu_dtype)

    # Weights: (cout, (kh, kw, cin)) with the bias folded in as an extra column.
    w_t = jnp.transpose(w_hwio.reshape(K, C))                           # (C, 9C)
    w_t = jnp.concatenate(
        [w_t, bias.reshape(C, 1), jnp.zeros((C, K_pad - K - 1), w_t.dtype)],
        axis=1).astype(mxu_dtype)                                       # (C, K_pad)

    gain_arr = jnp.full((1,), gain, jnp.float32)

    separate_skip = not f32_operands
    operands = [gain_arr, patches_t, w_t]
    in_specs = [
        pl.BlockSpec(memory_space=pltpu.MemorySpace.SMEM),              # gain scalar
        pl.BlockSpec((K_pad, tm), lambda m: (0, m)),                    # patches
        pl.BlockSpec((C, K_pad), lambda m: (0, 0)),                     # weights (+bias)
    ]
    if separate_skip:
        # f32 skip path (never quantized): exactly x[:, :, ::2, ::2], lane-dense.
        center = jnp.transpose(x_nchw[:, :, ::2, ::2], (1, 0, 2, 3)).reshape(C, M)
        skip_t = jnp.pad(center, ((0, 0), (0, Mp - M)))                 # f32
        operands.append(skip_t)
        in_specs.append(pl.BlockSpec((C, tm), lambda m: (0, m)))

    out_t = pl.pallas_call(
        functools.partial(_residual_conv_down_kernel, cin=C,
                          separate_skip=separate_skip),
        out_shape=jax.ShapeDtypeStruct((C, Mp), x_nchw.dtype),
        grid=(Mp // tm,),
        in_specs=in_specs,
        out_specs=pl.BlockSpec((C, tm), lambda m: (0, m)),
        compiler_params=pltpu.CompilerParams(
            dimension_semantics=("parallel",)),
    )(*operands)

    # (C, N*OH*OW) -> (N, C, OH, OW)   (module contract is NCHW)
    return jnp.transpose(out_t[:, :M].reshape(C, N, OH, OW), (1, 0, 2, 3))


def residual_conv_downsample_reference(x_nchw, w_hwio, bias, gain=1.0):
    """Pure-JAX reference matching the PyTorch module."""
    w_oihw = jnp.transpose(w_hwio, (3, 2, 0, 1))
    dx = lax.conv_general_dilated(
        x_nchw, w_oihw, window_strides=(2, 2), padding=((1, 1), (1, 1)),
        dimension_numbers=("NCHW", "OIHW", "NCHW"))
    dx = dx + bias[None, :, None, None]
    up = x_nchw[:, :, ::2, ::2]            # Upsample(scale_factor=0.5), nearest
    if gain != 1.0:
        up = up * gain
    return up + dx


if __name__ == "__main__":
    N, C, H, W = 2, 4, 16, 16

    key = jax.random.PRNGKey(0)
    kx, kw, kb = jax.random.split(key, 3)

    x = jax.random.normal(kx, (N, C, H, W), dtype=jnp.float32)
    fan_in = C * 3 * 3
    bound = 1.0 / (fan_in ** 0.5)
    w = jax.random.uniform(kw, (3, 3, C, C), jnp.float32, -bound, bound)
    b = jax.random.uniform(kb, (C,), jnp.float32, -bound, bound)

    fwd = jax.jit(residual_conv_downsample,
                  static_argnames=("block_m", "mxu_dtype"))

    ref = jax.block_until_ready(residual_conv_downsample_reference(x, w, b))

    # f32 path (default): exact semantics, center-tap skip reused from VMEM.
    out = jax.block_until_ready(fwd(x, w, b))
    assert out.shape == (N, C, H // 2, W // 2), out.shape
    assert jnp.allclose(out, ref, atol=1e-4, rtol=1e-4), "f32 mismatch vs reference"

    # runtime gain (same compilation, no Python-float bake-in).
    out_g = jax.block_until_ready(fwd(x, w, b, gain=0.7))
    ref_g = residual_conv_downsample_reference(x, w, b, gain=0.7)
    assert jnp.allclose(out_g, ref_g, atol=1e-4, rtol=1e-4), "gain path mismatch"

    # bf16 MXU operands (production path); skip path stays f32 -> loose matmul tol.
    out_bf = jax.block_until_ready(fwd(x, w, b, mxu_dtype=jnp.bfloat16))
    assert jnp.allclose(out_bf, ref, atol=1e-1, rtol=1e-1), "bf16 mismatch vs reference"

    print("KERNEL_OK")
</pallas_src>

<mosaic_0001>
module attributes {stable_mosaic.version = 11 : i64} {
  func.func @_residual_conv_down_kernel(%arg0: i32, %arg1: memref<1xf32, #tpu.memory_space<smem>>, %arg2: memref<40x128xf32, #tpu.memory_space<vmem>>, %arg3: memref<4x40xf32, #tpu.memory_space<vmem>>, %arg4: memref<4x128xf32, #tpu.memory_space<vmem>>) attributes {dimension_semantics = [#tpu.dimension_semantics<parallel>], iteration_bounds = array<i64: 1>, scalar_prefetch = 0 : i64, scratch_operands = 0 : i64, tpu.core_type = #tpu.core_type<tc>, window_params = [{transform_indices = @transform_0, window_bounds = array<i64: 1>}, {transform_indices = @transform_1, window_bounds = array<i64: 40, 128>}, {pipeline_mode = #tpu.pipeline_mode<synchronous>, transform_indices = @transform_2, window_bounds = array<i64: 4, 40>}, {transform_indices = @transform_3, window_bounds = array<i64: 4, 128>}]} {
    %c0 = arith.constant 0 : index
    %c0_0 = arith.constant 0 : index
    %0 = vector.load %arg2[%c0, %c0_0] : memref<40x128xf32, #tpu.memory_space<vmem>>, vector<40x128xf32>
    %c0_1 = arith.constant 0 : index
    %c0_2 = arith.constant 0 : index
    %1 = vector.load %arg3[%c0_1, %c0_2] : memref<4x40xf32, #tpu.memory_space<vmem>>, vector<4x40xf32>
    %cst = arith.constant dense<0.000000e+00> : vector<4x128xf32>
    %2 = tpu.matmul %1, %0, %cst {dimension_numbers = #tpu.dot_dimension_numbers<[1], [0], [0], [1], [0, 0, 1, 1], [], []>} : vector<4x40xf32>, vector<40x128xf32>, vector<4x128xf32> -> vector<4x128xf32>
    %3 = vector.extract_strided_slice %0 {offsets = [16, 0], sizes = [4, 128], strides = [1, 1]} : vector<40x128xf32> to vector<4x128xf32>
    %c0_3 = arith.constant 0 : index
    %4 = memref.load %arg1[%c0_3] : memref<1xf32, #tpu.memory_space<smem>>
    %5 = vector.broadcast %4 : f32 to vector<4x128xf32>
    %6 = arith.mulf %3, %5 : vector<4x128xf32>
    %7 = arith.addf %2, %6 : vector<4x128xf32>
    %c0_4 = arith.constant 0 : index
    %c0_5 = arith.constant 0 : index
    %8 = vector.load %arg4[%c0_4, %c0_5] : memref<4x128xf32, #tpu.memory_space<vmem>>, vector<4x128xf32>
    tpu.vector_store %arg4[%c0_4, %c0_5], %7 {strides = array<i32>} : memref<4x128xf32, #tpu.memory_space<vmem>>, vector<4x128xf32>,
    return
  }
  func.func @transform_0(%arg0: i32) -> i32 {
    %c0_i32 = arith.constant 0 : i32
    %c0_i32_0 = arith.constant 0 : i32
    return %c0_i32 : i32
  }
  func.func @transform_1(%arg0: i32) -> (i32, i32) {
    %c0_i32 = arith.constant 0 : i32
    %c0_i32_0 = arith.constant 0 : i32
    return %c0_i32, %arg0 : i32, i32
  }
  func.func @transform_2(%arg0: i32) -> (i32, i32) {
    %c0_i32 = arith.constant 0 : i32
    %c0_i32_0 = arith.constant 0 : i32
    %c0_i32_1 = arith.constant 0 : i32
    return %c0_i32, %c0_i32_0 : i32, i32
  }
  func.func @transform_3(%arg0: i32) -> (i32, i32) {
    %c0_i32 = arith.constant 0 : i32
    %c0_i32_0 = arith.constant 0 : i32
    return %c0_i32, %arg0 : i32, i32
  }
}

</mosaic_0001>

<llo_original>
// kernel: residual_conv_downsample.1
$region0: #{residual_conv_downsample.1}
  #allocation0 [shape = 'u32[]', space=smem, size = 0x4, offset = 0x4, fixed_abs, tag = 'smem constant byte address 0x4 - core index']
  #allocation1 [shape = 'u32[144,128]{1,0:T(1,128)}', space=vmem, size = 0x12000, scoped, tag = 'internal scratch']
  #allocation2 [shape = 'f32[1]{0:T(128)S(6)}', space=smem, size = 0x200, scoped, tag = 'scoped memory for residual_conv_downsample.1']
  %s0 = inlined_call_operand.<no memory space> [shape: f32[1], index: 0, kind: input, shape index: {}]
  %s1 = inlined_call_operand.vmem [shape: f32[40,128], index: 1, kind: input, shape index: {}]
  %s2 = inlined_call_operand.vmem [shape: f32[4,40], index: 2, kind: input, shape index: {}]
  %s3 = inlined_call_operand.vmem [shape: f32[4,128], index: 3, kind: output, shape index: {}]
  %s4 = sld [smem:[#allocation0]]
  $region22: #{residual_conv_downsample.1} parent=0
    _
  %s6 = ssub.s32 1, %s4
  %s7 = scalar_select 0, %s6, %s4
  %8 = sst [smem:[#allocation2]] %s0
  // Predicated region
  $region2: #{residual_conv_downsample.1} parent=0 // pred_check
    _
  $region3: #{residual_conv_downsample.1} parent=0 // pred_check_branch
    %10 = sbr.rel (0) target = $region5
  $region4: #{residual_conv_downsample.1} parent=0 // pred_region
    _
  $region5: #{residual_conv_downsample.1} parent=0 // pred_fallthru
    _
  // Predicated region
  $region6: #{residual_conv_downsample.1} parent=0 // pred_check
    _
  $region7: #{residual_conv_downsample.1} parent=0 // pred_check_branch
    %12 = sbr.rel (0) target = $region9
  $region8: #{residual_conv_downsample.1} parent=0 // pred_region
    _
  $region9: #{residual_conv_downsample.1} parent=0 // pred_fallthru
    _
  // Predicated region
  $region10: #{residual_conv_downsample.1} parent=0 // pred_check
    _
  $region11: #{residual_conv_downsample.1} parent=0 // pred_check_branch
    %14 = sbr.rel (0) target = $region13
  $region12: #{residual_conv_downsample.1} parent=0 // pred_region
    _
  $region13: #{residual_conv_downsample.1} parent=0 // pred_fallthru
    _
  %v15 = vld [vmem:[%s1] sm:$0xff]
  %v16 = vld [vmem:[%s1 + $0x8] sm:$0xff]
  %v17 = vld [vmem:[%s1 + $0x10] sm:$0xff]
  %v18 = vld [vmem:[%s1 + $0x18] sm:$0xff]
  %v19 = vld [vmem:[%s1 + $0x20] sm:$0xff]
  %v20 = vld [vmem:[%s2] sm:$0xf]
  %s21 = sld [smem:[#allocation2]]
  %v22 = vstv %s21
  %v23 = vmul.f32 %v17, %v22
  %vm24 = vcmask 326656
  %v26 = vsel %vm24, %v20, 0
  %28 = vmatprep.subr.mxu0 0.0
  %29 = vmatpush1.msra.mxu0 0.0
  %30 = vmatprep.subr.mxu0 0.0
  %31 = vmatpush1.msra.mxu0 0.0
  %32 = vmatprep.subr.mxu0 0.0
  %33 = vmatpush1.msra.mxu0 0.0
  %34 = vmatprep.subr.mxu0 0.0
  %35 = vmatpush1.msra.mxu0 0.0
  %36 = vmatprep.subr.mxu0 0.0
  %37 = vmatpush1.msra.mxu0 0.0
  %38 = vmatprep.subr.mxu0 0.0
  %39 = vmatpush1.msra.mxu0 0.0
  %40 = vmatprep.subr.mxu0 0.0
  %41 = vmatpush1.msra.mxu0 0.0
  %42 = vmatprep.subr.mxu0 0.0
  %43 = vmatpush1.msra.mxu0 0.0
  %44 = vmatprep.subr.mxu0 0.0
  %45 = vmatpush1.msra.mxu0 0.0
  %46 = vmatprep.subr.mxu0 0.0
  %47 = vmatpush1.msra.mxu0 0.0
  %48 = vmatprep.subr.mxu0 0.0
  %49 = vmatpush1.msra.mxu0 0.0
  %50 = vmatprep.subr.mxu0 0.0
  %51 = vmatpush1.msra.mxu0 %v19
  %52 = vmatprep.subr.mxu0 0.0
  %53 = vmatpush1.msra.mxu0 %v18
  %54 = vmatprep.subr.mxu0 0.0
  %55 = vmatpush1.msra.mxu0 %v17
  %56 = vmatprep.subr.mxu0 0.0
  %57 = vmatpush1.msra.mxu0 %v16
  %58 = vmatprep.subr.mxu0 0.0
  %59 = vmatpush1.msra.mxu0 %v15
  %60 = vmatprep.subr.mxu0 0.0
  %61 = vmatpush2.msra.mxu0 0.0
  %62 = vmatprep.subr.mxu0 0.0
  %63 = vmatpush2.msra.mxu0 0.0
  %64 = vmatprep.subr.mxu0 0.0
  %65 = vmatpush2.msra.mxu0 0.0
  %66 = vmatprep.subr.mxu0 0.0
  %67 = vmatpush2.msra.mxu0 0.0
  %68 = vmatprep.subr.mxu0 0.0
  %69 = vmatpush2.msra.mxu0 0.0
  %70 = vmatprep.subr.mxu0 0.0
  %71 = vmatpush2.msra.mxu0 0.0
  %72 = vmatprep.subr.mxu0 0.0
  %73 = vmatpush2.msra.mxu0 0.0
  %74 = vmatprep.subr.mxu0 0.0
  %75 = vmatpush2.msra.mxu0 0.0
  %76 = vmatprep.subr.mxu0 0.0
  %77 = vmatpush2.msra.mxu0 0.0
  %78 = vmatprep.subr.mxu0 0.0
  %79 = vmatpush2.msra.mxu0 0.0
  %80 = vmatprep.subr.mxu0 0.0
  %81 = vmatpush2.msra.mxu0 0.0
  %82 = vmatprep.subr.mxu0 0.0
  %83 = vmatpush2.msra.mxu0 0.0
  %84 = vmatprep.subr.mxu0 0.0
  %85 = vmatpush2.msra.mxu0 0.0
  %86 = vmatprep.subr.mxu0 0.0
  %87 = vmatpush2.msra.mxu0 0.0
  %88 = vmatprep.subr.mxu0 0.0
  %89 = vmatpush2.msra.mxu0 0.0
  %90 = vmatprep.subr.mxu0 0.0
  %91 = vmatpush2.msra.mxu0 0.0
  %92 = vmatprep.mubr.f32.mxu0 0.0
  %93 = vmatmul.mubr.f32.gmra.mxu0 %v26
  %v94 = vpop.f32.mrf.mxu0
  %v95 = vadd.f32 %v23, %v94
  %v96 = vpop.f32.mrf.mxu0
  %97 = vdwg.mxu0
  %98 = vst [vmem:[%s3] sm:$0xf] %v95
  // Predicated region
  $region14: #{residual_conv_downsample.1} parent=0 // pred_check
    _
  $region15: #{residual_conv_downsample.1} parent=0 // pred_check_branch
    %100 = sbr.rel (0) target = $region17
  $region16: #{residual_conv_downsample.1} parent=0 // pred_region
    _
  $region17: #{residual_conv_downsample.1} parent=0 // pred_fallthru
    _
  // Predicated region
  $region18: #{residual_conv_downsample.1} parent=0 // pred_check
    _
  $region19: #{residual_conv_downsample.1} parent=0 // pred_check_branch
    %102 = sbr.rel (0) target = $region21
  $region20: #{residual_conv_downsample.1} parent=0 // pred_region
    _
  $region21: #{residual_conv_downsample.1} parent=0 // pred_fallthru
    _

</llo_original>
